<compile_context>
chip_gen: v7x
topology: tpu7x:2x2x1
jax: 0.10.0
libtpu: 0.0.40
codegen_flags: <defaults>
</compile_context>

<pallas_src>
import math
import functools

import jax
import jax.numpy as jnp
from jax import lax
from jax.experimental import pallas as pl
from jax.experimental.pallas import tpu as pltpu

_INV_SQRT2 = 1.0 / math.sqrt(2.0)
_TANH_C = math.sqrt(2.0 / math.pi)


def _round_up(x, m):
    return ((x + m - 1) // m) * m


def _bert_intermediate_kernel(x_ref, w_ref, b_ref, o_ref, *, approx_gelu):
    """Fused dense + bias + GELU on one output tile.

    x_ref: (tm, H)   activations (matmul dtype)
    w_ref: (H, tw)   weight tile (torch Linear weight pre-transposed)
    b_ref: (1, tw)   bias tile, already f32
    o_ref: (tm, tw)  output tile
    """
    # MXU matmul with f32 accumulation.
    y = jnp.dot(x_ref[...], w_ref[...], preferred_element_type=jnp.float32)
    y = y + b_ref[...]  # bias already f32 -> no per-step astype/broadcast churn
    if approx_gelu:
        # tanh-approx GELU: transcendental runs on the EUP (separate bundle slot).
        act = 0.5 * y * (1.0 + jnp.tanh(_TANH_C * (y + 0.044715 * (y * y * y))))
    else:
        # BERT's exact gelu: 0.5 * x * (1 + erf(x / sqrt(2)))
        act = 0.5 * y * (1.0 + lax.erf(y * _INV_SQRT2))
    o_ref[...] = act.astype(o_ref.dtype)


def bert_intermediate(hidden_states, weight_t, bias, *, tm=None, tn=None,
                      matmul_dtype=None, out_dtype=None, weight_resident=None,
                      approx_gelu=False):
    """BertIntermediate forward: GELU(hidden_states @ W^T + b).

    hidden_states: (B, S, H); weight_t: (H, I) (torch weight transposed); bias: (I,).
    Returns (B, S, I).  Wrap the call site in jax.jit for production use.
    """
    B, S, H = hidden_states.shape
    Hw, I = weight_t.shape
    assert Hw == H
    M = B * S

    in_dtype = hidden_states.dtype
    if matmul_dtype is None:
        matmul_dtype = in_dtype
    if out_dtype is None:
        out_dtype = in_dtype

    cb = jnp.dtype(matmul_dtype).itemsize
    ob = jnp.dtype(out_dtype).itemsize
    # packed-sublane row granularity for the matmul dtype
    sub = {4: 8, 2: 16, 1: 32}.get(cb, 8)

    # ---- generation-aware VMEM budget -------------------------------------
    try:
        vmem_cap = int(pltpu.get_tpu_info().vmem_capacity_bytes)
    except Exception:
        vmem_cap = 64 << 20  # conservative (v7x per-TC)
    budget = int(0.72 * vmem_cap)         # residency / tiling decision threshold
    hard_cap = int(0.90 * vmem_cap)       # vmem_limit ceiling (headroom for scratch)

    # ---- row tile (MXU/sublane aligned; >=2 tiles for megacore when possible) ----
    tm_auto = tm is None
    if tm_auto:
        if M <= sub:
            tm = M
        elif M <= 2 * sub:
            tm = sub
        else:
            tm = min(512, _round_up(pl.cdiv(M, 2), sub))
    tn_auto = tn is None

    # VMEM footprints (include the f32 matmul+GELU intermediate, ~2x its size).
    def _vmem_a(tm_, w_bufs):
        return (2 * tm_ * H * cb            # x, double-buffered
                + w_bufs * H * I * cb       # resident weight
                + w_bufs * I * 4            # resident f32 bias
                + 2 * tm_ * I * ob          # output, double-buffered
                + 2 * tm_ * I * 4)          # f32 dot result + erf temporaries

    def _vmem_b(tm_, tn_):
        return (2 * (tm_ * H * cb + H * tn_ * cb + tn_ * 4 + tm_ * tn_ * ob)
                + 2 * tm_ * tn_ * 4)

    # ---- weight-resident decision (Variant A) ------------------------------
    if weight_resident is None:
        tm_try = tm
        if tm_auto:
            while tm_try > 128 and _vmem_a(tm_try, 1) > budget:
                tm_try = _round_up(max(tm_try // 2, sub), sub)
        if _vmem_a(tm_try, 1) <= budget:
            weight_resident = True
            tm = tm_try
        else:
            weight_resident = False

    x2d = hidden_states.reshape(M, H)
    if x2d.dtype != matmul_dtype:
        x2d = x2d.astype(matmul_dtype)
    w = weight_t if weight_t.dtype == matmul_dtype else weight_t.astype(matmul_dtype)
    b_f32 = bias.astype(jnp.float32).reshape(1, I)

    kern = functools.partial(_bert_intermediate_kernel, approx_gelu=approx_gelu)

    if weight_resident:
        # ---- Variant A: whole (H, I) weight resident in VMEM, grid over rows only.
        n_row = pl.cdiv(M, tm)
        cost = pl.CostEstimate(
            flops=2 * M * H * I,
            transcendentals=M * I,
            bytes_accessed=M * H * cb + H * I * cb + I * 4 + M * I * ob,
        )

        def _call(single_buffer):
            res_kw = {"pipeline_mode": pl.Buffered(1)} if single_buffer else {}
            in_specs = [
                pl.BlockSpec((tm, H), lambda i: (i, 0)),            # row tiles of x
                pl.BlockSpec((H, I), lambda i: (0, 0), **res_kw),   # resident weight
                pl.BlockSpec((1, I), lambda i: (0, 0), **res_kw),   # resident f32 bias
            ]
            out_specs = pl.BlockSpec((tm, I), lambda i: (i, 0))
            need = _vmem_a(tm, 1 if single_buffer else 2)
            vmem_limit = int(min(max(need + (4 << 20), 32 << 20), hard_cap))
            return pl.pallas_call(
                kern,
                out_shape=jax.ShapeDtypeStruct((M, I), out_dtype),
                grid_spec=pltpu.PrefetchScalarGridSpec(
                    num_scalar_prefetch=0, grid=(n_row,),
                    in_specs=in_specs, out_specs=out_specs),
                compiler_params=pltpu.CompilerParams(
                    dimension_semantics=("parallel",),
                    vmem_limit_bytes=vmem_limit),
                cost_estimate=cost,
            )(x2d, w, b_f32)

        try:
            out2d = _call(True)       # single-buffered resident weight/bias
        except Exception:
            out2d = _call(False)      # fallback: default double-buffered specs
    else:
        # ---- Variant B: stream weight column tiles; reuse-maximizing grid order.
        if tn_auto:
            tn = I if I < 128 else min(1024, (I // 128) * 128)
        if tm_auto or tn_auto:
            while _vmem_b(tm, tn) > budget and (tn > 128 or tm > sub):
                if tn >= tm and tn > 128:
                    tn = max(128, tn // 2)
                elif tm > max(sub, 64):
                    tm = _round_up(max(tm // 2, sub), sub)
                else:
                    break
        n_row = pl.cdiv(M, tm)
        n_col = pl.cdiv(I, tn)

        # Pick the grid order minimizing re-streamed HBM bytes:
        #   column-outer re-reads x (n_col-1) extra times; row-outer re-reads W/b.
        extra_col_outer = (n_col - 1) * M * H
        extra_row_outer = (n_row - 1) * H * I
        if extra_col_outer <= extra_row_outer:
            grid = (n_col, n_row)
            in_specs = [
                pl.BlockSpec((tm, H), lambda j, i: (i, 0)),
                pl.BlockSpec((H, tn), lambda j, i: (0, j)),
                pl.BlockSpec((1, tn), lambda j, i: (0, j)),
            ]
            out_specs = pl.BlockSpec((tm, tn), lambda j, i: (i, j))
            bytes_acc = n_col * M * H * cb + H * I * cb + I * 4 + M * I * ob
        else:
            grid = (n_row, n_col)
            in_specs = [
                pl.BlockSpec((tm, H), lambda i, j: (i, 0)),
                pl.BlockSpec((H, tn), lambda i, j: (0, j)),
                pl.BlockSpec((1, tn), lambda i, j: (0, j)),
            ]
            out_specs = pl.BlockSpec((tm, tn), lambda i, j: (i, j))
            bytes_acc = M * H * cb + n_row * (H * I * cb + I * 4) + M * I * ob

        cost = pl.CostEstimate(flops=2 * M * H * I, transcendentals=M * I,
                               bytes_accessed=bytes_acc)
        need = _vmem_b(tm, tn)
        vmem_limit = int(min(max(need + (4 << 20), 32 << 20), hard_cap))
        out2d = pl.pallas_call(
            kern,
            out_shape=jax.ShapeDtypeStruct((M, I), out_dtype),
            grid_spec=pltpu.PrefetchScalarGridSpec(
                num_scalar_prefetch=0, grid=grid,
                in_specs=in_specs, out_specs=out_specs),
            compiler_params=pltpu.CompilerParams(
                dimension_semantics=("parallel", "parallel"),
                vmem_limit_bytes=vmem_limit),
            cost_estimate=cost,
        )(x2d, w, b_f32)

    return out2d.reshape(B, S, I)


def _reference(hidden_states, weight_t, bias):
    y = jnp.einsum(
        "bsh,hi->bsi",
        hidden_states.astype(jnp.float32),
        weight_t.astype(jnp.float32),
    ) + bias.astype(jnp.float32)
    return 0.5 * y * (1.0 + lax.erf(y * _INV_SQRT2))


if __name__ == "__main__":
    key = jax.random.PRNGKey(0)
    k1, k2, k3, k4, k5, k6 = jax.random.split(key, 6)

    # --- Test 1: toy f32 config (hidden=32, intermediate=128); weight-resident path.
    B, S, H, I = 2, 8, 32, 128
    x = jax.random.normal(k1, (B, S, H), dtype=jnp.float32)
    w_t = jax.random.normal(k2, (H, I), dtype=jnp.float32) * 0.02
    b = jax.random.normal(k3, (I,), dtype=jnp.float32) * 0.02

    out = jax.block_until_ready(bert_intermediate(x, w_t, b))
    ref = _reference(x, w_t, b)
    assert out.shape == (B, S, I)
    assert jnp.allclose(out, ref, atol=1e-5, rtol=1e-5), "f32 path mismatch"

    # --- Test 2: bf16 operands, streamed-weight path, ragged M/I (masked tail blocks).
    B2, S2, H2, I2 = 2, 104, 96, 384
    x2 = jax.random.normal(k4, (B2, S2, H2), dtype=jnp.bfloat16)
    w2 = (jax.random.normal(k5, (H2, I2), dtype=jnp.float32) * 0.02).astype(jnp.bfloat16)
    b2 = (jax.random.normal(k6, (I2,), dtype=jnp.float32) * 0.02).astype(jnp.bfloat16)

    out2 = jax.block_until_ready(
        bert_intermediate(x2, w2, b2, tm=128, tn=128, weight_resident=False)
    )
    ref2 = _reference(x2, w2, b2)
    assert out2.shape == (B2, S2, I2)
    assert jnp.allclose(out2.astype(jnp.float32), ref2, atol=2e-2, rtol=2e-2), \
        "bf16 path mismatch"

    print("KERNEL_OK")
</pallas_src>

<mosaic_0001>
module attributes {stable_mosaic.version = 11 : i64} {
  func.func @_bert_intermediate_kernel(%arg0: i32, %arg1: memref<8x32xf32, #tpu.memory_space<vmem>>, %arg2: memref<32x128xf32, #tpu.memory_space<vmem>>, %arg3: memref<1x128xf32, #tpu.memory_space<vmem>>, %arg4: memref<8x128xf32, #tpu.memory_space<vmem>>) attributes {dimension_semantics = [#tpu.dimension_semantics<parallel>], iteration_bounds = array<i64: 2>, scalar_prefetch = 0 : i64, scratch_operands = 0 : i64, tpu.core_type = #tpu.core_type<tc>, window_params = [{transform_indices = @transform_0, window_bounds = array<i64: 8, 32>}, {pipeline_mode = #tpu.pipeline_mode<synchronous>, transform_indices = @transform_1, window_bounds = array<i64: 32, 128>}, {pipeline_mode = #tpu.pipeline_mode<synchronous>, transform_indices = @transform_2, window_bounds = array<i64: 1, 128>}, {transform_indices = @transform_3, window_bounds = array<i64: 8, 128>}]} {
    %c0 = arith.constant 0 : index
    %c0_0 = arith.constant 0 : index
    %0 = vector.load %arg1[%c0, %c0_0] : memref<8x32xf32, #tpu.memory_space<vmem>>, vector<8x32xf32>
    %c0_1 = arith.constant 0 : index
    %c0_2 = arith.constant 0 : index
    %1 = vector.load %arg2[%c0_1, %c0_2] : memref<32x128xf32, #tpu.memory_space<vmem>>, vector<32x128xf32>
    %cst = arith.constant dense<0.000000e+00> : vector<8x128xf32>
    %2 = tpu.matmul %0, %1, %cst {dimension_numbers = #tpu.dot_dimension_numbers<[1], [0], [0], [1], [0, 0, 1, 1], [], []>} : vector<8x32xf32>, vector<32x128xf32>, vector<8x128xf32> -> vector<8x128xf32>
    %c0_3 = arith.constant 0 : index
    %c0_4 = arith.constant 0 : index
    %3 = vector.load %arg3[%c0_3, %c0_4] : memref<1x128xf32, #tpu.memory_space<vmem>>, vector<1x128xf32>
    %4 = vector.broadcast %3 : vector<1x128xf32> to vector<8x128xf32>
    %5 = arith.addf %2, %4 : vector<8x128xf32>
    %cst_5 = arith.constant 5.000000e-01 : f32
    %6 = vector.broadcast %cst_5 : f32 to vector<8x128xf32>
    %7 = arith.mulf %6, %5 : vector<8x128xf32>
    %cst_6 = arith.constant 0.707106769 : f32
    %8 = vector.broadcast %cst_6 : f32 to vector<8x128xf32>
    %9 = arith.mulf %5, %8 : vector<8x128xf32>
    %10 = math.erf %9 : vector<8x128xf32>
    %cst_7 = arith.constant 1.000000e+00 : f32
    %11 = vector.broadcast %cst_7 : f32 to vector<8x128xf32>
    %12 = arith.addf %11, %10 : vector<8x128xf32>
    %13 = arith.mulf %7, %12 : vector<8x128xf32>
    %c0_8 = arith.constant 0 : index
    %c0_9 = arith.constant 0 : index
    %14 = vector.load %arg4[%c0_8, %c0_9] : memref<8x128xf32, #tpu.memory_space<vmem>>, vector<8x128xf32>
    tpu.vector_store %arg4[%c0_8, %c0_9], %13 {strides = array<i32>} : memref<8x128xf32, #tpu.memory_space<vmem>>, vector<8x128xf32>,
    return
  }
  func.func @transform_0(%arg0: i32) -> (i32, i32) {
    %c0_i32 = arith.constant 0 : i32
    %c0_i32_0 = arith.constant 0 : i32
    return %arg0, %c0_i32 : i32, i32
  }
  func.func @transform_1(%arg0: i32) -> (i32, i32) {
    %c0_i32 = arith.constant 0 : i32
    %c0_i32_0 = arith.constant 0 : i32
    %c0_i32_1 = arith.constant 0 : i32
    return %c0_i32, %c0_i32_0 : i32, i32
  }
  func.func @transform_2(%arg0: i32) -> (i32, i32) {
    %c0_i32 = arith.constant 0 : i32
    %c0_i32_0 = arith.constant 0 : i32
    %c0_i32_1 = arith.constant 0 : i32
    return %c0_i32, %c0_i32_0 : i32, i32
  }
  func.func @transform_3(%arg0: i32) -> (i32, i32) {
    %c0_i32 = arith.constant 0 : i32
    %c0_i32_0 = arith.constant 0 : i32
    return %arg0, %c0_i32 : i32, i32
  }
}

module attributes {stable_mosaic.version = 11 : i64} {
  func.func @_bert_intermediate_kernel(%arg0: i32, %arg1: memref<8x32xf32, #tpu.memory_space<vmem>>, %arg2: memref<32x128xf32, #tpu.memory_space<vmem>>, %arg3: memref<1x128xf32, #tpu.memory_space<vmem>>, %arg4: memref<8x128xf32, #tpu.memory_space<vmem>>) attributes {dimension_semantics = [#tpu.dimension_semantics<parallel>], iteration_bounds = array<i64: 2>, scalar_prefetch = 0 : i64, scratch_operands = 0 : i64, tpu.core_type = #tpu.core_type<tc>, window_params = [{transform_indices = @transform_0, window_bounds = array<i64: 8, 32>}, {pipeline_mode = #tpu.pipeline_mode<synchronous>, transform_indices = @transform_1, window_bounds = array<i64: 32, 128>}, {pipeline_mode = #tpu.pipeline_mode<synchronous>, transform_indices = @transform_2, window_bounds = array<i64: 1, 128>}, {transform_indices = @transform_3, window_bounds = array<i64: 8, 128>}]} {
    %c0 = arith.constant 0 : index
    %c0_0 = arith.constant 0 : index
    %0 = vector.load %arg1[%c0, %c0_0] : memref<8x32xf32, #tpu.memory_space<vmem>>, vector<8x32xf32>
    %c0_1 = arith.constant 0 : index
    %c0_2 = arith.constant 0 : index
    %1 = vector.load %arg2[%c0_1, %c0_2] : memref<32x128xf32, #tpu.memory_space<vmem>>, vector<32x128xf32>
    %cst = arith.constant dense<0.000000e+00> : vector<8x128xf32>
    %2 = tpu.matmul %0, %1, %cst {dimension_numbers = #tpu.dot_dimension_numbers<[1], [0], [0], [1], [0, 0, 1, 1], [], []>} : vector<8x32xf32>, vector<32x128xf32>, vector<8x128xf32> -> vector<8x128xf32>
    %c0_3 = arith.constant 0 : index
    %c0_4 = arith.constant 0 : index
    %3 = vector.load %arg3[%c0_3, %c0_4] : memref<1x128xf32, #tpu.memory_space<vmem>>, vector<1x128xf32>
    %4 = vector.broadcast %3 : vector<1x128xf32> to vector<8x128xf32>
    %5 = arith.addf %2, %4 : vector<8x128xf32>
    %cst_5 = arith.constant 5.000000e-01 : f32
    %6 = vector.broadcast %cst_5 : f32 to vector<8x128xf32>
    %7 = arith.mulf %6, %5 : vector<8x128xf32>
    %cst_6 = arith.constant 0.707106769 : f32
    %8 = vector.broadcast %cst_6 : f32 to vector<8x128xf32>
    %9 = arith.mulf %5, %8 : vector<8x128xf32>
    %10 = math.erf %9 : vector<8x128xf32>
    %cst_7 = arith.constant 1.000000e+00 : f32
    %11 = vector.broadcast %cst_7 : f32 to vector<8x128xf32>
    %12 = arith.addf %11, %10 : vector<8x128xf32>
    %13 = arith.mulf %7, %12 : vector<8x128xf32>
    %c0_8 = arith.constant 0 : index
    %c0_9 = arith.constant 0 : index
    %14 = vector.load %arg4[%c0_8, %c0_9] : memref<8x128xf32, #tpu.memory_space<vmem>>, vector<8x128xf32>
    tpu.vector_store %arg4[%c0_8, %c0_9], %13 {strides = array<i32>} : memref<8x128xf32, #tpu.memory_space<vmem>>, vector<8x128xf32>,
    return
  }
  func.func @transform_0(%arg0: i32) -> (i32, i32) {
    %c0_i32 = arith.constant 0 : i32
    %c0_i32_0 = arith.constant 0 : i32
    return %arg0, %c0_i32 : i32, i32
  }
  func.func @transform_1(%arg0: i32) -> (i32, i32) {
    %c0_i32 = arith.constant 0 : i32
    %c0_i32_0 = arith.constant 0 : i32
    %c0_i32_1 = arith.constant 0 : i32
    return %c0_i32, %c0_i32_0 : i32, i32
  }
  func.func @transform_2(%arg0: i32) -> (i32, i32) {
    %c0_i32 = arith.constant 0 : i32
    %c0_i32_0 = arith.constant 0 : i32
    %c0_i32_1 = arith.constant 0 : i32
    return %c0_i32, %c0_i32_0 : i32, i32
  }
  func.func @transform_3(%arg0: i32) -> (i32, i32) {
    %c0_i32 = arith.constant 0 : i32
    %c0_i32_0 = arith.constant 0 : i32
    return %arg0, %c0_i32 : i32, i32
  }
}

</mosaic_0001>

<llo_original>
// kernel: tpu_custom_call.1
$region0: #{tpu_custom_call.1}
  #allocation0 [shape = 'u32[]', space=smem, size = 0x4, offset = 0x4, fixed_abs, tag = 'smem constant byte address 0x4 - core index']
  #allocation1 [shape = 'u32[144,128]{1,0:T(1,128)}', space=vmem, size = 0x12000, scoped, tag = 'internal scratch']
  %s0 = inlined_call_operand.hbm [shape: f32[16,32], index: 0, kind: input, shape index: {}]
  %s1 = inlined_call_operand.hbm [shape: f32[32,128], index: 1, kind: input, shape index: {}]
  %s2 = inlined_call_operand.vmem [shape: f32[1,128], index: 2, kind: input, shape index: {}]
  %s3 = inlined_call_operand.hbm [shape: f32[16,128], index: 3, kind: output, shape index: {}]
  %s4 = sld [smem:[#allocation0]]
  $region53: #{tpu_custom_call.1} parent=0
    _
  %s6 = ssub.s32 1, %s4
  %s7 = scalar_select 0, %s6, %s4
  $region1: #{tpu_custom_call.1} parent=0
    #allocation2 [shape = 'u8[8192]{0}', space=vmem, size = 0x2000, scoped, tag = 'input window, operand 0']
    #allocation3 [shape = 's32[2]{0}', space=sflag, size = 0x8, scoped, tag = 'scoped memory for tpu_custom_call.1']
    #allocation4 [shape = 's32[2]{0}', space=sflag, size = 0x8, scoped, tag = 'scoped memory for tpu_custom_call.1']
    #allocation5 [shape = 'u8[16384]{0}', space=vmem, size = 0x4000, scoped, tag = 'input window, operand 1, single buffered']
    #allocation6 [shape = 's32[1]{0}', space=sflag, size = 0x4, scoped, tag = 'scoped memory for tpu_custom_call.1']
    #allocation7 [shape = 'u8[8192]{0}', space=vmem, size = 0x2000, scoped, tag = 'output window, operand 0']
    %8 = vsyncpa [#allocation3], 0
    %s9 = scalar_lea.sflag [#allocation3], 1
    %10 = vsyncpa %s9, 0
    %11 = vsyncpa [#allocation6], 0
    %12 = vsyncpa [#allocation4], 0
    %s13 = scalar_lea.sflag [#allocation4], 1
    %14 = vsyncpa %s13, 0
    loop: start=0, step=1, limit=4
    $region2: #{tpu_custom_call.1} parent=1 // loop_pre_header
      _
    $region3: #{tpu_custom_call.1} parent=1 // loop_header
      %s16 = sphi 0, %s20
      %p17 = scmp.ge.s32.totalorder %s16, 4
      %s26 = sphi 0, %s28
      %s29 = sphi 0, %s26
      %s30 = sphi 0, %s29
      %s46 = sphi 0, %s30
      %s50 = sphi 0, %s50
      %s52 = sphi 0, %s50
      %s53 = sphi 0, %s52
      %s67 = sphi 0, %s53
      %s71 = sphi 0, %s71
      %s73 = sphi 0, %s71
      %s74 = sphi 0, %s73
      %s88 = sphi 0, %s74
      %s94 = sphi 0, %s96
      %s97 = sphi 0, %s94
      %s98 = sphi 0, %s97
      %s114 = sphi 0, %s98
    $region4: #{tpu_custom_call.1} parent=1 // loop_header_branch
      %19 = sbr.rel (%p17) target = $region8
    $region5: #{tpu_custom_call.1} parent=1 // loop_body
      %s21 = ssub.s32 %s16, 1
      %s22 = ssub.s32 %s16, 2
      %s23 = sadd.s32 %s16, 1
      %s24 = ssub.s32 %s16, %s23
      %p25 = scmp.eq.s32.totalorder %s24, 0
      %s27 = sadd.s32 %s26, 1
      %s28 = scalar_select %p25, %s26, %s27
      %p31 = pneg %p25
      %p32 = scmp.eq.s32.totalorder %s16, 1
      %p33 = por %p31, %p32
      %p34 = scmp.ne.s32.totalorder %s26, %s29
      %p35 = scmp.eq.s32.totalorder %s16, 0
      %p36 = por %p34, %p35
      %p37 = scmp.ne.s32.totalorder %s26, %s29
      %p38 = scmp.eq.s32.totalorder %s21, 1
      %p39 = por %p37, %p38
      %p40 = scmp.ne.s32.totalorder %s29, %s30
      %p41 = scmp.eq.s32.totalorder %s21, 0
      %p42 = por %p40, %p41
      %p43 = scmp.ne.s32.totalorder %s29, %s30
      %p44 = scmp.eq.s32.totalorder %s22, 1
      %p45 = por %p43, %p44
      %p47 = scmp.ne.s32.totalorder %s30, %s46
      %p48 = scmp.eq.s32.totalorder %s22, 0
      %p49 = por %p47, %p48
      %s51 = sadd.s32 %s50, 1
      %p54 = scmp.eq.s32.totalorder %s16, 1
      %p55 = scmp.ne.s32.totalorder %s50, %s52
      %p56 = scmp.eq.s32.totalorder %s16, 0
      %p57 = por %p55, %p56
      %p58 = scmp.ne.s32.totalorder %s50, %s52
      %p59 = scmp.eq.s32.totalorder %s21, 1
      %p60 = por %p58, %p59
      %p61 = scmp.ne.s32.totalorder %s52, %s53
      %p62 = scmp.eq.s32.totalorder %s21, 0
      %p63 = por %p61, %p62
      %p64 = scmp.ne.s32.totalorder %s52, %s53
      %p65 = scmp.eq.s32.totalorder %s22, 1
      %p66 = por %p64, %p65
      %p68 = scmp.ne.s32.totalorder %s53, %s67
      %p69 = scmp.eq.s32.totalorder %s22, 0
      %p70 = por %p68, %p69
      %s72 = sadd.s32 %s71, 1
      %p75 = scmp.eq.s32.totalorder %s16, 1
      %p76 = scmp.ne.s32.totalorder %s71, %s73
      %p77 = scmp.eq.s32.totalorder %s16, 0
      %p78 = por %p76, %p77
      %p79 = scmp.ne.s32.totalorder %s71, %s73
      %p80 = scmp.eq.s32.totalorder %s21, 1
      %p81 = por %p79, %p80
      %p82 = scmp.ne.s32.totalorder %s73, %s74
      %p83 = scmp.eq.s32.totalorder %s21, 0
      %p84 = por %p82, %p83
      %p85 = scmp.ne.s32.totalorder %s73, %s74
      %p86 = scmp.eq.s32.totalorder %s22, 1
      %p87 = por %p85, %p86
      %p89 = scmp.ne.s32.totalorder %s74, %s88
      %p90 = scmp.eq.s32.totalorder %s22, 0
      %p91 = por %p89, %p90
      %s92 = ssub.s32 %s16, %s23
      %p93 = scmp.eq.s32.totalorder %s92, 0
      %s95 = sadd.s32 %s94, 1
      %s96 = scalar_select %p93, %s94, %s95
      %p99 = pneg %p93
      %p100 = scmp.eq.s32.totalorder %s16, 1
      %p101 = por %p99, %p100
      %p102 = scmp.ne.s32.totalorder %s94, %s97
      %p103 = scmp.eq.s32.totalorder %s16, 0
      %p104 = por %p102, %p103
      %p105 = scmp.ne.s32.totalorder %s94, %s97
      %p106 = scmp.eq.s32.totalorder %s21, 1
      %p107 = por %p105, %p106
      %p108 = scmp.ne.s32.totalorder %s97, %s98
      %p109 = scmp.eq.s32.totalorder %s21, 0
      %p110 = por %p108, %p109
      %p111 = scmp.ne.s32.totalorder %s97, %s98
      %p112 = scmp.eq.s32.totalorder %s22, 1
      %p113 = por %p111, %p112
      %p115 = scmp.ne.s32.totalorder %s98, %s114
      %p116 = scmp.eq.s32.totalorder %s22, 0
      %p117 = por %p115, %p116
      %p118 = scmp.le.s32.totalorder 1, %s16
      %p119 = scmp.lt.s32.totalorder %s16, 3
      %p120 = pnand %p118, %p119
      %p121 = pneg %p120
      // Predicated region
      $region9: #{tpu_custom_call.1} parent=5 // pred_check
        _
      $region10: #{tpu_custom_call.1} parent=5 // pred_check_branch
        %123 = sbr.rel (%p120) target = $region12
      $region11: #{tpu_custom_call.1} parent=5 // pred_region
        %s124 = ssub.s32 %s16, 1
        // Predicated region
        $region13: #{tpu_custom_call.1} parent=11 // pred_check
          %p125 = pneg %p63
        $region14: #{tpu_custom_call.1} parent=11 // pred_check_branch
          %127 = sbr.rel (%p125) target = $region16
        $region15: #{tpu_custom_call.1} parent=11 // pred_region
          %s129 = ssub.s32 512, 512
          %130 = vsyncadd [#allocation6], %s129
          %s131 = sshll.u32 [#allocation5], 4
          %s132 = int_to_ptr.vmem [resolvable:$true] %s131
          %137 = dma.hbm_to_vmem [thread:$0]  %s1, 512, %s132, [#allocation6], 128, 128, 8
        $region16: #{tpu_custom_call.1} parent=11 // pred_fallthru
          _
        // Predicated region
        $region17: #{tpu_custom_call.1} parent=11 // pred_check
          %p138 = pneg %p84
        $region18: #{tpu_custom_call.1} parent=11 // pred_check_branch
          %140 = sbr.rel (%p138) target = $region20
        $region19: #{tpu_custom_call.1} parent=11 // pred_region
          _
        $region20: #{tpu_custom_call.1} parent=11 // pred_fallthru
          _
      $region12: #{tpu_custom_call.1} parent=5 // pred_fallthru
        _
      %p141 = scmp.lt.s32.totalorder %s16, 2
      // Predicated region
      $region21: #{tpu_custom_call.1} parent=5 // pred_check
        %p142 = pneg %p141
      $region22: #{tpu_custom_call.1} parent=5 // pred_check_branch
        %144 = sbr.rel (%p142) target = $region24
      $region23: #{tpu_custom_call.1} parent=5 // pred_region
        // Predicated region
        $region25: #{tpu_custom_call.1} parent=23 // pred_check
          %p145 = pneg %p36
        $region26: #{tpu_custom_call.1} parent=23 // pred_check_branch
          %147 = sbr.rel (%p145) target = $region28
        $region27: #{tpu_custom_call.1} parent=23 // pred_region
          %s148 = sand.u32 %s26, 1
          %s149 = scalar_lea.sflag [#allocation3], %s148
          %s150 = sand.u32 %s26, 1
          %s151 = smul.addr %s150, 8
          %s152 = scalar_lea.vmem [#allocation2], %s151
          %s154 = ssub.s32 128, 128
          %155 = vsyncadd %s149, %s154
          %s156 = smul.addr %s16, 128
          %s157 = scalar_lea.hbm %s0, %s156
          %s159 = sshll.u32 %s152, 4
          %s160 = int_to_ptr.vmem [resolvable:$true] %s159
          %162 = dma.hbm_to_vmem [thread:$0]  %s157, 128, %s160, %s149
        $region28: #{tpu_custom_call.1} parent=23 // pred_fallthru
          _
      $region24: #{tpu_custom_call.1} parent=5 // pred_fallthru
        _
      %p163 = scmp.le.s32.totalorder 1, %s16
      %p164 = scmp.lt.s32.totalorder %s16, 3
      %p165 = pnand %p163, %p164
      %p166 = pneg %p165
      // Predicated region
      $region29: #{tpu_custom_call.1} parent=5 // pred_check
        _
      $region30: #{tpu_custom_call.1} parent=5 // pred_check_branch
        %168 = sbr.rel (%p165) target = $region32
      $region31: #{tpu_custom_call.1} parent=5 // pred_region
        %s169 = ssub.s32 %s16, 1
        %s170 = sand.u32 %s29, 1
        %s171 = scalar_lea.sflag [#allocation3], %s170
        %s172 = sand.u32 %s29, 1
        %s173 = smul.addr %s172, 8
        %s174 = scalar_lea.vmem [#allocation2], %s173
        // Predicated region
        $region33: #{tpu_custom_call.1} parent=31 // pred_check
          %p175 = pneg %p42
        $region34: #{tpu_custom_call.1} parent=31 // pred_check_branch
          %177 = sbr.rel (%p175) target = $region36
        $region35: #{tpu_custom_call.1} parent=31 // pred_region
          %178 = dma.done %s171, 128
        $region36: #{tpu_custom_call.1} parent=31 // pred_fallthru
          _
        // Predicated region
        $region37: #{tpu_custom_call.1} parent=31 // pred_check
          %p179 = pneg %p63
        $region38: #{tpu_custom_call.1} parent=31 // pred_check_branch
          %181 = sbr.rel (%p179) target = $region40
        $region39: #{tpu_custom_call.1} parent=31 // pred_region
          %182 = dma.done [#allocation6], 512
        $region40: #{tpu_custom_call.1} parent=31 // pred_fallthru
          _
        %s183 = sand.u32 %s29, 1
        %s184 = scalar_lea.sflag [#allocation3], %s183
        %s185 = sand.u32 %s29, 1
        %s186 = smul.addr %s185, 8
        %s187 = scalar_lea.vmem [#allocation2], %s186
        %p188 = pneg %p42
        %p189 = pneg %p39
        %p190 = pneg %p63
        %p191 = pneg %p60
        %p192 = pneg %p84
        %p193 = pneg %p81
        %p194 = pneg %p110
        %p195 = pneg %p107
        %s196 = sand.u32 %s97, 1
        %s197 = scalar_lea.sflag [#allocation4], %s196
        %s198 = sand.u32 %s97, 1
        %s199 = smul.addr %s198, 8
        %s200 = scalar_lea.vmem [#allocation7], %s199
        %v201 = vld [vmem:[%s174] sm:$0xff]
        %v202 = vld [vmem:[#allocation5] sm:$0xff]
        %v203 = vld [vmem:[#allocation5 + $0x8] sm:$0xff]
        %v204 = vld [vmem:[#allocation5 + $0x10] sm:$0xff]
        %v205 = vld [vmem:[#allocation5 + $0x18] sm:$0xff]
        %v206 = vld [vmem:[%s2] sm:$0x1]
        %v208 = vlaneseq
        %v209 = vshrl.u32 %v208, 7
        %v210 = vsub.s32 0, %v209
        %v211 = vrot.slane %v206, %v210
        %vm213 = vcmask 261120
        %v215 = vsel %vm213, %v201, 0
        %217 = vmatprep.subr.mxu0 0.0
        %218 = vmatpush1.msra.mxu0 %v202
        %219 = vmatprep.subr.mxu0 0.0
        %220 = vmatpush1.msra.mxu0 %v203
        %221 = vmatprep.subr.mxu0 0.0
        %222 = vmatpush1.msra.mxu0 %v204
        %223 = vmatprep.subr.mxu0 0.0
        %224 = vmatpush1.msra.mxu0 %v205
        %225 = vmatprep.subr.mxu0 0.0
        %226 = vmatpush1.msra.mxu0 0.0
        %227 = vmatprep.subr.mxu0 0.0
        %228 = vmatpush1.msra.mxu0 0.0
        %229 = vmatprep.subr.mxu0 0.0
        %230 = vmatpush1.msra.mxu0 0.0
        %231 = vmatprep.subr.mxu0 0.0
        %232 = vmatpush1.msra.mxu0 0.0
        %233 = vmatprep.subr.mxu0 0.0
        %234 = vmatpush1.msra.mxu0 0.0
        %235 = vmatprep.subr.mxu0 0.0
        %236 = vmatpush1.msra.mxu0 0.0
        %237 = vmatprep.subr.mxu0 0.0
        %238 = vmatpush1.msra.mxu0 0.0
        %239 = vmatprep.subr.mxu0 0.0
        %240 = vmatpush1.msra.mxu0 0.0
        %241 = vmatprep.subr.mxu0 0.0
        %242 = vmatpush1.msra.mxu0 0.0
        %243 = vmatprep.subr.mxu0 0.0
        %244 = vmatpush1.msra.mxu0 0.0
        %245 = vmatprep.subr.mxu0 0.0
        %246 = vmatpush1.msra.mxu0 0.0
        %247 = vmatprep.subr.mxu0 0.0
        %248 = vmatpush1.msra.mxu0 0.0
        %249 = vmatprep.subr.mxu0 0.0
        %250 = vmatpush1.msra.mxu0 0.0
        %251 = vmatprep.subr.mxu0 0.0
        %252 = vmatpush1.msra.mxu0 0.0
        %253 = vmatprep.subr.mxu0 0.0
        %254 = vmatpush1.msra.mxu0 0.0
        %255 = vmatprep.subr.mxu0 0.0
        %256 = vmatpush1.msra.mxu0 0.0
        %257 = vmatprep.subr.mxu0 0.0
        %258 = vmatpush1.msra.mxu0 0.0
        %259 = vmatprep.subr.mxu0 0.0
        %260 = vmatpush1.msra.mxu0 0.0
        %261 = vmatprep.subr.mxu0 0.0
        %262 = vmatpush1.msra.mxu0 0.0
        %263 = vmatprep.subr.mxu0 0.0
        %264 = vmatpush1.msra.mxu0 0.0
        %265 = vmatprep.subr.mxu0 0.0
        %266 = vmatpush1.msra.mxu0 0.0
        %267 = vmatprep.subr.mxu0 0.0
        %268 = vmatpush1.msra.mxu0 0.0
        %269 = vmatprep.subr.mxu0 0.0
        %270 = vmatpush1.msra.mxu0 0.0
        %271 = vmatprep.subr.mxu0 0.0
        %272 = vmatpush1.msra.mxu0 0.0
        %273 = vmatprep.subr.mxu0 0.0
        %274 = vmatpush1.msra.mxu0 0.0
        %275 = vmatprep.subr.mxu0 0.0
        %276 = vmatpush1.msra.mxu0 0.0
        %277 = vmatprep.subr.mxu0 0.0
        %278 = vmatpush1.msra.mxu0 0.0
        %279 = vmatprep.subr.mxu0 0.0
        %280 = vmatpush1.msra.mxu0 0.0
        %281 = vmatprep.mubr.f32.mxu0 0.0
        %282 = vmatmul.mubr.f32.gmra.mrb[0].mxu0 %v215
        %v283 = vpop.f32.mrb[0].mxu0
        %v284 = vadd.f32 %v211, %v283
        %v285 = vpop.f32.mrb[0].mxu0
        %286 = vdwg.mxu0
        %v287 = vmul.f32 %v284, 0.5
        %v288 = vmul.f32 %v284, 0.70710677
        %v289 = verf.f32.pop %v288
        %v290 = vadd.f32 %v289, 1.0
        %v291 = vmul.f32 %v287, %v290
        %292 = vst [vmem:[%s200] sm:$0xff] %v291
        %s293 = sand.u32 %s97, 1
        %s294 = scalar_lea.sflag [#allocation4], %s293
        %s295 = sand.u32 %s97, 1
        %s296 = smul.addr %s295, 8
        %s297 = scalar_lea.vmem [#allocation7], %s296
        // Predicated region
        $region41: #{tpu_custom_call.1} parent=31 // pred_check
          %p298 = pneg %p107
        $region42: #{tpu_custom_call.1} parent=31 // pred_check_branch
          %300 = sbr.rel (%p298) target = $region44
        $region43: #{tpu_custom_call.1} parent=31 // pred_region
          %s302 = ssub.s32 128, 128
          %303 = vsyncadd %s294, %s302
          %s304 = smul.addr %s21, 128
          %s305 = scalar_lea.hbm %s3, %s304
          %s307 = sshll.u32 %s297, 4
          %s308 = int_to_ptr.vmem [resolvable:$true] %s307
          %310 = dma.vmem_to_hbm [thread:$0]  %s308, 128, %s305, %s294
        $region44: #{tpu_custom_call.1} parent=31 // pred_fallthru
          _
      $region32: #{tpu_custom_call.1} parent=5 // pred_fallthru
        _
      %p311 = scmp.le.s32.totalorder 2, %s16
      // Predicated region
      $region45: #{tpu_custom_call.1} parent=5 // pred_check
        %p312 = pneg %p311
      $region46: #{tpu_custom_call.1} parent=5 // pred_check_branch
        %314 = sbr.rel (%p312) target = $region48
      $region47: #{tpu_custom_call.1} parent=5 // pred_region
        %s315 = ssub.s32 %s16, 2
        // Predicated region
        $region49: #{tpu_custom_call.1} parent=47 // pred_check
          %p316 = pneg %p113
        $region50: #{tpu_custom_call.1} parent=47 // pred_check_branch
          %318 = sbr.rel (%p316) target = $region52
        $region51: #{tpu_custom_call.1} parent=47 // pred_region
          %s319 = sand.u32 %s98, 1
          %s320 = scalar_lea.sflag [#allocation4], %s319
          %s321 = sand.u32 %s98, 1
          %s322 = smul.addr %s321, 8
          %s323 = scalar_lea.vmem [#allocation7], %s322
          %324 = dma.done %s320, 128
        $region52: #{tpu_custom_call.1} parent=47 // pred_fallthru
          _
      $region48: #{tpu_custom_call.1} parent=5 // pred_fallthru
        _
    $region6: #{tpu_custom_call.1} parent=1 // loop_footer
      %s20 = sadd.s32 1, %s16
    $region7: #{tpu_custom_call.1} parent=1 // loop_footer_branch
      %15 = sbr.rel target = $region3
    $region8: #{tpu_custom_call.1} parent=1 // loop_exit
      _
    %325 = vsyncpa [#allocation3], 1
    %s326 = scalar_lea.sflag [#allocation3], 1
    %327 = vsyncpa %s326, 1
    %328 = vsyncpa [#allocation6], 1
    %329 = vsyncpa [#allocation4], 1
    %s330 = scalar_lea.sflag [#allocation4], 1
    %331 = vsyncpa %s330, 1

// kernel: tpu_custom_call.1
$region0: #{tpu_custom_call.1}
  #allocation0 [shape = 'u32[]', space=smem, size = 0x4, offset = 0x4, fixed_abs, tag = 'smem constant byte address 0x4 - core index']
  #allocation1 [shape = 'u32[144,128]{1,0:T(1,128)}', space=vmem, size = 0x12000, scoped, tag = 'internal scratch']
  %s0 = inlined_call_operand.hbm [shape: f32[16,32], index: 0, kind: input, shape index: {}]
  %s1 = inlined_call_operand.hbm [shape: f32[32,128], index: 1, kind: input, shape index: {}]
  %s2 = inlined_call_operand.vmem [shape: f32[1,128], index: 2, kind: input, shape index: {}]
  %s3 = inlined_call_operand.hbm [shape: f32[16,128], index: 3, kind: output, shape index: {}]
  %s4 = sld [smem:[#allocation0]]
  $region53: #{tpu_custom_call.1} parent=0
    _
  %s6 = ssub.s32 1, %s4
  %s7 = scalar_select 0, %s6, %s4
  $region1: #{tpu_custom_call.1} parent=0
    #allocation2 [shape = 'u8[8192]{0}', space=vmem, size = 0x2000, scoped, tag = 'input window, operand 0']
    #allocation3 [shape = 's32[2]{0}', space=sflag, size = 0x8, scoped, tag = 'scoped memory for tpu_custom_call.1']
    #allocation4 [shape = 's32[2]{0}', space=sflag, size = 0x8, scoped, tag = 'scoped memory for tpu_custom_call.1']
    #allocation5 [shape = 'u8[16384]{0}', space=vmem, size = 0x4000, scoped, tag = 'input window, operand 1, single buffered']
    #allocation6 [shape = 's32[1]{0}', space=sflag, size = 0x4, scoped, tag = 'scoped memory for tpu_custom_call.1']
    #allocation7 [shape = 'u8[8192]{0}', space=vmem, size = 0x2000, scoped, tag = 'output window, operand 0']
    %8 = vsyncpa [#allocation3], 0
    %s9 = scalar_lea.sflag [#allocation3], 1
    %10 = vsyncpa %s9, 0
    %11 = vsyncpa [#allocation6], 0
    %12 = vsyncpa [#allocation4], 0
    %s13 = scalar_lea.sflag [#allocation4], 1
    %14 = vsyncpa %s13, 0
    loop: start=0, step=1, limit=4
    $region2: #{tpu_custom_call.1} parent=1 // loop_pre_header
      _
    $region3: #{tpu_custom_call.1} parent=1 // loop_header
      %s16 = sphi 0, %s20
      %p17 = scmp.ge.s32.totalorder %s16, 4
      %s26 = sphi 0, %s28
      %s29 = sphi 0, %s26
      %s30 = sphi 0, %s29
      %s46 = sphi 0, %s30
      %s50 = sphi 0, %s50
      %s52 = sphi 0, %s50
      %s53 = sphi 0, %s52
      %s67 = sphi 0, %s53
      %s71 = sphi 0, %s71
      %s73 = sphi 0, %s71
      %s74 = sphi 0, %s73
      %s88 = sphi 0, %s74
      %s94 = sphi 0, %s96
      %s97 = sphi 0, %s94
      %s98 = sphi 0, %s97
      %s114 = sphi 0, %s98
    $region4: #{tpu_custom_call.1} parent=1 // loop_header_branch
      %19 = sbr.rel (%p17) target = $region8
    $region5: #{tpu_custom_call.1} parent=1 // loop_body
      %s21 = ssub.s32 %s16, 1
      %s22 = ssub.s32 %s16, 2
      %s23 = sadd.s32 %s16, 1
      %s24 = ssub.s32 %s16, %s23
      %p25 = scmp.eq.s32.totalorder %s24, 0
      %s27 = sadd.s32 %s26, 1
      %s28 = scalar_select %p25, %s26, %s27
      %p31 = pneg %p25
      %p32 = scmp.eq.s32.totalorder %s16, 1
      %p33 = por %p31, %p32
      %p34 = scmp.ne.s32.totalorder %s26, %s29
      %p35 = scmp.eq.s32.totalorder %s16, 0
      %p36 = por %p34, %p35
      %p37 = scmp.ne.s32.totalorder %s26, %s29
      %p38 = scmp.eq.s32.totalorder %s21, 1
      %p39 = por %p37, %p38
      %p40 = scmp.ne.s32.totalorder %s29, %s30
      %p41 = scmp.eq.s32.totalorder %s21, 0
      %p42 = por %p40, %p41
      %p43 = scmp.ne.s32.totalorder %s29, %s30
      %p44 = scmp.eq.s32.totalorder %s22, 1
      %p45 = por %p43, %p44
      %p47 = scmp.ne.s32.totalorder %s30, %s46
      %p48 = scmp.eq.s32.totalorder %s22, 0
      %p49 = por %p47, %p48
      %s51 = sadd.s32 %s50, 1
      %p54 = scmp.eq.s32.totalorder %s16, 1
      %p55 = scmp.ne.s32.totalorder %s50, %s52
      %p56 = scmp.eq.s32.totalorder %s16, 0
      %p57 = por %p55, %p56
      %p58 = scmp.ne.s32.totalorder %s50, %s52
      %p59 = scmp.eq.s32.totalorder %s21, 1
      %p60 = por %p58, %p59
      %p61 = scmp.ne.s32.totalorder %s52, %s53
      %p62 = scmp.eq.s32.totalorder %s21, 0
      %p63 = por %p61, %p62
      %p64 = scmp.ne.s32.totalorder %s52, %s53
      %p65 = scmp.eq.s32.totalorder %s22, 1
      %p66 = por %p64, %p65
      %p68 = scmp.ne.s32.totalorder %s53, %s67
      %p69 = scmp.eq.s32.totalorder %s22, 0
      %p70 = por %p68, %p69
      %s72 = sadd.s32 %s71, 1
      %p75 = scmp.eq.s32.totalorder %s16, 1
      %p76 = scmp.ne.s32.totalorder %s71, %s73
      %p77 = scmp.eq.s32.totalorder %s16, 0
      %p78 = por %p76, %p77
      %p79 = scmp.ne.s32.totalorder %s71, %s73
      %p80 = scmp.eq.s32.totalorder %s21, 1
      %p81 = por %p79, %p80
      %p82 = scmp.ne.s32.totalorder %s73, %s74
      %p83 = scmp.eq.s32.totalorder %s21, 0
      %p84 = por %p82, %p83
      %p85 = scmp.ne.s32.totalorder %s73, %s74
      %p86 = scmp.eq.s32.totalorder %s22, 1
      %p87 = por %p85, %p86
      %p89 = scmp.ne.s32.totalorder %s74, %s88
      %p90 = scmp.eq.s32.totalorder %s22, 0
      %p91 = por %p89, %p90
      %s92 = ssub.s32 %s16, %s23
      %p93 = scmp.eq.s32.totalorder %s92, 0
      %s95 = sadd.s32 %s94, 1
      %s96 = scalar_select %p93, %s94, %s95
      %p99 = pneg %p93
      %p100 = scmp.eq.s32.totalorder %s16, 1
      %p101 = por %p99, %p100
      %p102 = scmp.ne.s32.totalorder %s94, %s97
      %p103 = scmp.eq.s32.totalorder %s16, 0
      %p104 = por %p102, %p103
      %p105 = scmp.ne.s32.totalorder %s94, %s97
      %p106 = scmp.eq.s32.totalorder %s21, 1
      %p107 = por %p105, %p106
      %p108 = scmp.ne.s32.totalorder %s97, %s98
      %p109 = scmp.eq.s32.totalorder %s21, 0
      %p110 = por %p108, %p109
      %p111 = scmp.ne.s32.totalorder %s97, %s98
      %p112 = scmp.eq.s32.totalorder %s22, 1
      %p113 = por %p111, %p112
      %p115 = scmp.ne.s32.totalorder %s98, %s114
      %p116 = scmp.eq.s32.totalorder %s22, 0
      %p117 = por %p115, %p116
      %p118 = scmp.le.s32.totalorder 1, %s16
      %p119 = scmp.lt.s32.totalorder %s16, 3
      %p120 = pnand %p118, %p119
      %p121 = pneg %p120
      // Predicated region
      $region9: #{tpu_custom_call.1} parent=5 // pred_check
        _
      $region10: #{tpu_custom_call.1} parent=5 // pred_check_branch
        %123 = sbr.rel (%p120) target = $region12
      $region11: #{tpu_custom_call.1} parent=5 // pred_region
        %s124 = ssub.s32 %s16, 1
        // Predicated region
        $region13: #{tpu_custom_call.1} parent=11 // pred_check
          %p125 = pneg %p63
        $region14: #{tpu_custom_call.1} parent=11 // pred_check_branch
          %127 = sbr.rel (%p125) target = $region16
        $region15: #{tpu_custom_call.1} parent=11 // pred_region
          %s129 = ssub.s32 512, 512
          %130 = vsyncadd [#allocation6], %s129
          %s131 = sshll.u32 [#allocation5], 4
          %s132 = int_to_ptr.vmem [resolvable:$true] %s131
          %137 = dma.hbm_to_vmem [thread:$0]  %s1, 512, %s132, [#allocation6], 128, 128, 8
        $region16: #{tpu_custom_call.1} parent=11 // pred_fallthru
          _
        // Predicated region
        $region17: #{tpu_custom_call.1} parent=11 // pred_check
          %p138 = pneg %p84
        $region18: #{tpu_custom_call.1} parent=11 // pred_check_branch
          %140 = sbr.rel (%p138) target = $region20
        $region19: #{tpu_custom_call.1} parent=11 // pred_region
          _
        $region20: #{tpu_custom_call.1} parent=11 // pred_fallthru
          _
      $region12: #{tpu_custom_call.1} parent=5 // pred_fallthru
        _
      %p141 = scmp.lt.s32.totalorder %s16, 2
      // Predicated region
      $region21: #{tpu_custom_call.1} parent=5 // pred_check
        %p142 = pneg %p141
      $region22: #{tpu_custom_call.1} parent=5 // pred_check_branch
        %144 = sbr.rel (%p142) target = $region24
      $region23: #{tpu_custom_call.1} parent=5 // pred_region
        // Predicated region
        $region25: #{tpu_custom_call.1} parent=23 // pred_check
          %p145 = pneg %p36
        $region26: #{tpu_custom_call.1} parent=23 // pred_check_branch
          %147 = sbr.rel (%p145) target = $region28
        $region27: #{tpu_custom_call.1} parent=23 // pred_region
          %s148 = sand.u32 %s26, 1
          %s149 = scalar_lea.sflag [#allocation3], %s148
          %s150 = sand.u32 %s26, 1
          %s151 = smul.addr %s150, 8
          %s152 = scalar_lea.vmem [#allocation2], %s151
          %s154 = ssub.s32 128, 128
          %155 = vsyncadd %s149, %s154
          %s156 = smul.addr %s16, 128
          %s157 = scalar_lea.hbm %s0, %s156
          %s159 = sshll.u32 %s152, 4
          %s160 = int_to_ptr.vmem [resolvable:$true] %s159
          %162 = dma.hbm_to_vmem [thread:$0]  %s157, 128, %s160, %s149
        $region28: #{tpu_custom_call.1} parent=23 // pred_fallthru
          _
      $region24: #{tpu_custom_call.1} parent=5 // pred_fallthru
        _
      %p163 = scmp.le.s32.totalorder 1, %s16
      %p164 = scmp.lt.s32.totalorder %s16, 3
      %p165 = pnand %p163, %p164
      %p166 = pneg %p165
      // Predicated region
      $region29: #{tpu_custom_call.1} parent=5 // pred_check
        _
      $region30: #{tpu_custom_call.1} parent=5 // pred_check_branch
        %168 = sbr.rel (%p165) target = $region32
      $region31: #{tpu_custom_call.1} parent=5 // pred_region
        %s169 = ssub.s32 %s16, 1
        %s170 = sand.u32 %s29, 1
        %s171 = scalar_lea.sflag [#allocation3], %s170
        %s172 = sand.u32 %s29, 1
        %s173 = smul.addr %s172, 8
        %s174 = scalar_lea.vmem [#allocation2], %s173
        // Predicated region
        $region33: #{tpu_custom_call.1} parent=31 // pred_check
          %p175 = pneg %p42
        $region34: #{tpu_custom_call.1} parent=31 // pred_check_branch
          %177 = sbr.rel (%p175) target = $region36
        $region35: #{tpu_custom_call.1} parent=31 // pred_region
          %178 = dma.done %s171, 128
        $region36: #{tpu_custom_call.1} parent=31 // pred_fallthru
          _
        // Predicated region
        $region37: #{tpu_custom_call.1} parent=31 // pred_check
          %p179 = pneg %p63
        $region38: #{tpu_custom_call.1} parent=31 // pred_check_branch
          %181 = sbr.rel (%p179) target = $region40
        $region39: #{tpu_custom_call.1} parent=31 // pred_region
          %182 = dma.done [#allocation6], 512
        $region40: #{tpu_custom_call.1} parent=31 // pred_fallthru
          _
        %s183 = sand.u32 %s29, 1
        %s184 = scalar_lea.sflag [#allocation3], %s183
        %s185 = sand.u32 %s29, 1
        %s186 = smul.addr %s185, 8
        %s187 = scalar_lea.vmem [#allocation2], %s186
        %p188 = pneg %p42
        %p189 = pneg %p39
        %p190 = pneg %p63
        %p191 = pneg %p60
        %p192 = pneg %p84
        %p193 = pneg %p81
        %p194 = pneg %p110
        %p195 = pneg %p107
        %s196 = sand.u32 %s97, 1
        %s197 = scalar_lea.sflag [#allocation4], %s196
        %s198 = sand.u32 %s97, 1
        %s199 = smul.addr %s198, 8
        %s200 = scalar_lea.vmem [#allocation7], %s199
        %v201 = vld [vmem:[%s174] sm:$0xff]
        %v202 = vld [vmem:[#allocation5] sm:$0xff]
        %v203 = vld [vmem:[#allocation5 + $0x8] sm:$0xff]
        %v204 = vld [vmem:[#allocation5 + $0x10] sm:$0xff]
        %v205 = vld [vmem:[#allocation5 + $0x18] sm:$0xff]
        %v206 = vld [vmem:[%s2] sm:$0x1]
        %v208 = vlaneseq
        %v209 = vshrl.u32 %v208, 7
        %v210 = vsub.s32 0, %v209
        %v211 = vrot.slane %v206, %v210
        %vm213 = vcmask 261120
        %v215 = vsel %vm213, %v201, 0
        %217 = vmatprep.subr.mxu0 0.0
        %218 = vmatpush1.msra.mxu0 %v202
        %219 = vmatprep.subr.mxu0 0.0
        %220 = vmatpush1.msra.mxu0 %v203
        %221 = vmatprep.subr.mxu0 0.0
        %222 = vmatpush1.msra.mxu0 %v204
        %223 = vmatprep.subr.mxu0 0.0
        %224 = vmatpush1.msra.mxu0 %v205
        %225 = vmatprep.subr.mxu0 0.0
        %226 = vmatpush1.msra.mxu0 0.0
        %227 = vmatprep.subr.mxu0 0.0
        %228 = vmatpush1.msra.mxu0 0.0
        %229 = vmatprep.subr.mxu0 0.0
        %230 = vmatpush1.msra.mxu0 0.0
        %231 = vmatprep.subr.mxu0 0.0
        %232 = vmatpush1.msra.mxu0 0.0
        %233 = vmatprep.subr.mxu0 0.0
        %234 = vmatpush1.msra.mxu0 0.0
        %235 = vmatprep.subr.mxu0 0.0
        %236 = vmatpush1.msra.mxu0 0.0
        %237 = vmatprep.subr.mxu0 0.0
        %238 = vmatpush1.msra.mxu0 0.0
        %239 = vmatprep.subr.mxu0 0.0
        %240 = vmatpush1.msra.mxu0 0.0
        %241 = vmatprep.subr.mxu0 0.0
        %242 = vmatpush1.msra.mxu0 0.0
        %243 = vmatprep.subr.mxu0 0.0
        %244 = vmatpush1.msra.mxu0 0.0
        %245 = vmatprep.subr.mxu0 0.0
        %246 = vmatpush1.msra.mxu0 0.0
        %247 = vmatprep.subr.mxu0 0.0
        %248 = vmatpush1.msra.mxu0 0.0
        %249 = vmatprep.subr.mxu0 0.0
        %250 = vmatpush1.msra.mxu0 0.0
        %251 = vmatprep.subr.mxu0 0.0
        %252 = vmatpush1.msra.mxu0 0.0
        %253 = vmatprep.subr.mxu0 0.0
        %254 = vmatpush1.msra.mxu0 0.0
        %255 = vmatprep.subr.mxu0 0.0
        %256 = vmatpush1.msra.mxu0 0.0
        %257 = vmatprep.subr.mxu0 0.0
        %258 = vmatpush1.msra.mxu0 0.0
        %259 = vmatprep.subr.mxu0 0.0
        %260 = vmatpush1.msra.mxu0 0.0
        %261 = vmatprep.subr.mxu0 0.0
        %262 = vmatpush1.msra.mxu0 0.0
        %263 = vmatprep.subr.mxu0 0.0
        %264 = vmatpush1.msra.mxu0 0.0
        %265 = vmatprep.subr.mxu0 0.0
        %266 = vmatpush1.msra.mxu0 0.0
        %267 = vmatprep.subr.mxu0 0.0
        %268 = vmatpush1.msra.mxu0 0.0
        %269 = vmatprep.subr.mxu0 0.0
        %270 = vmatpush1.msra.mxu0 0.0
        %271 = vmatprep.subr.mxu0 0.0
        %272 = vmatpush1.msra.mxu0 0.0
        %273 = vmatprep.subr.mxu0 0.0
        %274 = vmatpush1.msra.mxu0 0.0
        %275 = vmatprep.subr.mxu0 0.0
        %276 = vmatpush1.msra.mxu0 0.0
        %277 = vmatprep.subr.mxu0 0.0
        %278 = vmatpush1.msra.mxu0 0.0
        %279 = vmatprep.subr.mxu0 0.0
        %280 = vmatpush1.msra.mxu0 0.0
        %281 = vmatprep.mubr.f32.mxu0 0.0
        %282 = vmatmul.mubr.f32.gmra.mrb[0].mxu0 %v215
        %v283 = vpop.f32.mrb[0].mxu0
        %v284 = vadd.f32 %v211, %v283
        %v285 = vpop.f32.mrb[0].mxu0
        %286 = vdwg.mxu0
        %v287 = vmul.f32 %v284, 0.5
        %v288 = vmul.f32 %v284, 0.70710677
        %v289 = verf.f32.pop %v288
        %v290 = vadd.f32 %v289, 1.0
        %v291 = vmul.f32 %v287, %v290
        %292 = vst [vmem:[%s200] sm:$0xff] %v291
        %s293 = sand.u32 %s97, 1
        %s294 = scalar_lea.sflag [#allocation4], %s293
        %s295 = sand.u32 %s97, 1
        %s296 = smul.addr %s295, 8
        %s297 = scalar_lea.vmem [#allocation7], %s296
        // Predicated region
        $region41: #{tpu_custom_call.1} parent=31 // pred_check
          %p298 = pneg %p107
        $region42: #{tpu_custom_call.1} parent=31 // pred_check_branch
          %300 = sbr.rel (%p298) target = $region44
        $region43: #{tpu_custom_call.1} parent=31 // pred_region
          %s302 = ssub.s32 128, 128
          %303 = vsyncadd %s294, %s302
          %s304 = smul.addr %s21, 128
          %s305 = scalar_lea.hbm %s3, %s304
          %s307 = sshll.u32 %s297, 4
          %s308 = int_to_ptr.vmem [resolvable:$true] %s307
          %310 = dma.vmem_to_hbm [thread:$0]  %s308, 128, %s305, %s294
        $region44: #{tpu_custom_call.1} parent=31 // pred_fallthru
          _
      $region32: #{tpu_custom_call.1} parent=5 // pred_fallthru
        _
      %p311 = scmp.le.s32.totalorder 2, %s16
      // Predicated region
      $region45: #{tpu_custom_call.1} parent=5 // pred_check
        %p312 = pneg %p311
      $region46: #{tpu_custom_call.1} parent=5 // pred_check_branch
        %314 = sbr.rel (%p312) target = $region48
      $region47: #{tpu_custom_call.1} parent=5 // pred_region
        %s315 = ssub.s32 %s16, 2
        // Predicated region
        $region49: #{tpu_custom_call.1} parent=47 // pred_check
          %p316 = pneg %p113
        $region50: #{tpu_custom_call.1} parent=47 // pred_check_branch
          %318 = sbr.rel (%p316) target = $region52
        $region51: #{tpu_custom_call.1} parent=47 // pred_region
          %s319 = sand.u32 %s98, 1
          %s320 = scalar_lea.sflag [#allocation4], %s319
          %s321 = sand.u32 %s98, 1
          %s322 = smul.addr %s321, 8
          %s323 = scalar_lea.vmem [#allocation7], %s322
          %324 = dma.done %s320, 128
        $region52: #{tpu_custom_call.1} parent=47 // pred_fallthru
          _
      $region48: #{tpu_custom_call.1} parent=5 // pred_fallthru
        _
    $region6: #{tpu_custom_call.1} parent=1 // loop_footer
      %s20 = sadd.s32 1, %s16
    $region7: #{tpu_custom_call.1} parent=1 // loop_footer_branch
      %15 = sbr.rel target = $region3
    $region8: #{tpu_custom_call.1} parent=1 // loop_exit
      _
    %325 = vsyncpa [#allocation3], 1
    %s326 = scalar_lea.sflag [#allocation3], 1
    %327 = vsyncpa %s326, 1
    %328 = vsyncpa [#allocation6], 1
    %329 = vsyncpa [#allocation4], 1
    %s330 = scalar_lea.sflag [#allocation4], 1
    %331 = vsyncpa %s330, 1

</llo_original>
